<compile_context>
chip_gen: v7x
topology: tpu7x:2x2x1
jax: 0.10.0
libtpu: 0.0.40
codegen_flags: <defaults>
</compile_context>

<pallas_src>
import functools

import jax
import jax.numpy as jnp
from jax.experimental import pallas as pl
from jax.experimental.pallas import tpu as pltpu


LANE = 128


def _round_up(n, m):
    return ((n + m - 1) // m) * m


# ------------------------------- kernel --------------------------------------

def ta3n_kernel(x_ref, wsp_ref, bsp_ref, wgy_ref, bgy_ref, wclf_ref, bclf_ref,
                logits_ref, feats_ref, *, tb, t):
    """One batch tile.

    x_ref   : (tb*t, Dp) bf16   -- lane-dense 2-D input slab (no sublane padding)
    weights : (in, out) bf16    -- resident, single-buffered
    biases  : (1, out) f32
    """
    Dp = x_ref.shape[-1]

    # --- Spatial module FC: one big 2-D GEMM on the MXU (M = tb*t rows), f32 acc.
    h = jnp.dot(x_ref[...], wsp_ref[...], preferred_element_type=jnp.float32)
    h = jnp.maximum(h + bsp_ref[...], 0.0)                           # bias + ReLU, f32

    # --- TemPooling (AvgPool over segments): f32 sum over T * precomputed 1/T.
    #     The reshape is on f32 with T as the (8-multiple-friendly) sublane axis.
    pooled = h.reshape(tb, t, Dp).sum(axis=1) * (1.0 / t)            # (tb, Dp) f32

    # --- Gy FC (bf16 MXU inputs, f32 accumulate).
    g = jnp.dot(pooled.astype(jnp.bfloat16), wgy_ref[...],
                preferred_element_type=jnp.float32) + bgy_ref[...]
    g = jnp.maximum(g, 0.0)                                          # (tb, Dp) f32
    feats_ref[...] = g.astype(feats_ref.dtype)

    # --- fc_classifier_video.
    logits_ref[...] = (jnp.dot(g.astype(jnp.bfloat16), wclf_ref[...],
                               preferred_element_type=jnp.float32)
                       + bclf_ref[...]).astype(logits_ref.dtype)


# ---------------------------- param preparation ------------------------------

def prepare_params(w_sp, b_sp, w_gy, b_gy, w_clf, b_clf, *, weight_dtype=jnp.bfloat16):
    """One-time prep: PyTorch (out, in) weights -> (in, out), lane-padded, pre-cast."""
    D = w_sp.shape[1]
    C = w_clf.shape[0]
    Dp = _round_up(D, LANE)
    Cp = _round_up(C, LANE)

    def pad_w(w_t, rows, cols):  # w_t already (in, out)
        return jnp.pad(w_t, ((0, rows - w_t.shape[0]), (0, cols - w_t.shape[1])))

    def pad_b(b, cols):
        return jnp.pad(b.reshape(1, -1), ((0, 0), (0, cols - b.shape[0])))

    return {
        "w_sp": pad_w(w_sp.T, Dp, Dp).astype(weight_dtype),
        "b_sp": pad_b(b_sp, Dp).astype(jnp.float32),
        "w_gy": pad_w(w_gy.T, Dp, Dp).astype(weight_dtype),
        "b_gy": pad_b(b_gy, Dp).astype(jnp.float32),
        "w_clf": pad_w(w_clf.T, Dp, Cp).astype(weight_dtype),
        "b_clf": pad_b(b_clf, Cp).astype(jnp.float32),
        "D": D, "C": C, "Dp": Dp, "Cp": Cp,
    }


# ------------------------------ tiling / budget -------------------------------

def _pick_batch_tile(B, T):
    """MXU-fill driven tile pick: batch_tile*T >= 512 and batch_tile >= 128 when the
    batch allows; capped at the (8-rounded) batch so we never over-pad."""
    target = max(128, pl.cdiv(512, T))
    rounded_b = _round_up(B, 8)
    tile = min(target, rounded_b)
    # Prefer >= 2 grid steps (keeps v7x's second TensorCore busy via the "parallel"
    # grid axis) but only if the spatial GEMM stays reasonably fed after halving.
    if rounded_b // tile < 2:
        half = _round_up(pl.cdiv(rounded_b, 2), 8)
        if half * T >= 256:
            tile = half
    return max(tile, 8)


def _vmem_limit_bytes(tb, T, Dp, Cp, feats_itemsize):
    """Scoped-VMEM budget from actual buffer math (weights single-buffered)."""
    x_buf = 2 * tb * T * Dp * 2                       # double-buffered bf16 input tile
    w_buf = (2 * Dp * Dp + Dp * Cp) * 2               # single-buffered bf16 weights
    b_buf = (2 * Dp + Cp) * 4                         # biases, f32
    out_buf = 2 * (tb * Cp * 4 + tb * Dp * feats_itemsize)   # double-buffered outputs
    interm = tb * T * Dp * 4 + 2 * tb * Dp * 4        # live f32 h / pooled / g values
    need = x_buf + w_buf + b_buf + out_buf + interm
    budget = int(need * 1.5) + (8 << 20)              # headroom for compiler scratch
    try:
        phys = pltpu.get_tpu_info().vmem_capacity_bytes
    except Exception:
        phys = 64 << 20                               # conservative (v7x per-TC VMEM)
    return max(16 << 20, min(budget, int(phys * 0.7)))


# --------------------------------- wrapper ------------------------------------

def ta3n_forward(x, params, *, batch_tile=None, feats_dtype=jnp.float32):
    """x: (B, T, D) float32 clip features. Returns (logits (B, C), feats_gy (B, D))."""
    B, T, D = x.shape
    Dp, Cp = params["Dp"], params["Cp"]
    if batch_tile is None:
        batch_tile = _pick_batch_tile(B, T)
    Bp = _round_up(B, batch_tile)
    n_tiles = Bp // batch_tile
    M = batch_tile * T

    # Lane/batch padding on the wrapper side; flatten to a lane-dense 2-D bf16 slab so
    # the kernel's input tile is exactly the spatial-GEMM operand (no in-kernel bf16
    # relayout, no wasted sublane padding per (TB, T) slab).
    # NOTE: for real TA3N features with large dynamic range, keep x in f32 here and
    # cast only the weights if the bf16 input quantization costs accuracy.
    xp = jnp.pad(x, ((0, Bp - B), (0, 0), (0, Dp - D)))
    xp = xp.astype(jnp.bfloat16).reshape(Bp * T, Dp)

    # Constant-index (resident) params: single-buffered -> no double-buffer VMEM cost.
    def const_spec(shape):
        return pl.BlockSpec(shape, lambda i: (0, 0), pipeline_mode=pl.Buffered(1))

    feats_itemsize = jnp.dtype(feats_dtype).itemsize
    vmem_limit = _vmem_limit_bytes(batch_tile, T, Dp, Cp, feats_itemsize)

    flops = 2 * Bp * T * Dp * Dp + 2 * Bp * Dp * Dp + 2 * Bp * Dp * Cp
    bytes_accessed = (Bp * T * Dp * 2                               # x (bf16)
                      + (2 * Dp * Dp + Dp * Cp) * 2                 # weights (bf16)
                      + (2 * Dp + Cp) * 4                           # biases (f32)
                      + Bp * Cp * 4 + Bp * Dp * feats_itemsize)     # outputs

    kernel = functools.partial(ta3n_kernel, tb=batch_tile, t=T)

    logits_p, feats_p = pl.pallas_call(
        kernel,
        out_shape=(
            jax.ShapeDtypeStruct((Bp, Cp), jnp.float32),
            jax.ShapeDtypeStruct((Bp, Dp), feats_dtype),
        ),
        grid=(n_tiles,),
        in_specs=[
            pl.BlockSpec((M, Dp), lambda i: (i, 0)),      # x tile per grid step (streamed)
            const_spec((Dp, Dp)), const_spec((1, Dp)),    # spatial FC (resident)
            const_spec((Dp, Dp)), const_spec((1, Dp)),    # Gy FC (resident)
            const_spec((Dp, Cp)), const_spec((1, Cp)),    # classifier (resident)
        ],
        out_specs=(
            pl.BlockSpec((batch_tile, Cp), lambda i: (i, 0)),
            pl.BlockSpec((batch_tile, Dp), lambda i: (i, 0)),
        ),
        compiler_params=pltpu.CompilerParams(
            dimension_semantics=("parallel",),            # batch tiles split across TCs
            vmem_limit_bytes=vmem_limit,
        ),
        cost_estimate=pl.CostEstimate(
            flops=flops, transcendentals=0, bytes_accessed=bytes_accessed),
    )(xp, params["w_sp"], params["b_sp"], params["w_gy"], params["b_gy"],
      params["w_clf"], params["b_clf"])

    return logits_p[:B, :params["C"]], feats_p[:B, :params["D"]]


# ----------------------------- references ------------------------------------

def ta3n_reference(x, w_sp, b_sp, w_gy, b_gy, w_clf, b_clf):
    """Pure f32 reference matching the PyTorch eval-path math."""
    h = jnp.maximum(jnp.einsum('btd,ed->bte', x, w_sp) + b_sp, 0.0)
    pooled = jnp.mean(h, axis=1)
    g = jnp.maximum(pooled @ w_gy.T + b_gy, 0.0)
    return g @ w_clf.T + b_clf, g


def ta3n_reference_kernel_precision(x, w_sp, b_sp, w_gy, b_gy, w_clf, b_clf):
    """Same math, with the kernel's bf16 MXU-input rounding and pooling accumulation
    (f32 sum over T, scaled by 1/T) reproduced."""
    bf = lambda a: a.astype(jnp.bfloat16).astype(jnp.float32)
    T = x.shape[1]
    h = jnp.maximum(jnp.einsum('btd,ed->bte', bf(x), bf(w_sp)) + b_sp, 0.0)
    pooled = h.sum(axis=1) * (1.0 / T)
    g = jnp.maximum(bf(pooled) @ bf(w_gy).T + b_gy, 0.0)
    return bf(g) @ bf(w_clf).T + b_clf, g


# --------------------------------- demo ---------------------------------------

if __name__ == "__main__":
    # batch, segments (val_segments), feature dim, num_classes
    B, T, D, C = 16, 8, 32, 6

    key = jax.random.PRNGKey(0)
    kx, ksp, kgy, kclf = jax.random.split(key, 4)

    # Input clip features (B, T, D)
    x = jax.random.normal(kx, (B, T, D), dtype=jnp.float32)

    # Parameters per __init__: weights ~ N(0, 0.001), biases = 0 (PyTorch (out, in) layout)
    std = 0.001
    w_sp = std * jax.random.normal(ksp, (D, D), dtype=jnp.float32)    # Spatial module FC
    b_sp = jnp.zeros((D,), dtype=jnp.float32)
    w_gy = std * jax.random.normal(kgy, (D, D), dtype=jnp.float32)    # Gy FC
    b_gy = jnp.zeros((D,), dtype=jnp.float32)
    w_clf = std * jax.random.normal(kclf, (C, D), dtype=jnp.float32)  # fc_classifier_video
    b_clf = jnp.zeros((C,), dtype=jnp.float32)

    # One-time parameter prep (transpose + pad + cast happens once, not per call).
    params = prepare_params(w_sp, b_sp, w_gy, b_gy, w_clf, b_clf)

    logits, feats_gy = ta3n_forward(x, params)   # batch_tile auto-picked for MXU fill
    jax.block_until_ready(logits)
    jax.block_until_ready(feats_gy)

    # Strict check against a reference that reproduces the kernel's bf16 MXU inputs
    # and pooling accumulation order.
    refq_logits, refq_feats = ta3n_reference_kernel_precision(
        x, w_sp, b_sp, w_gy, b_gy, w_clf, b_clf)
    assert jnp.allclose(logits, refq_logits, rtol=1e-2, atol=1e-8), "logits mismatch (bf16 ref)"
    assert jnp.allclose(feats_gy, refq_feats, rtol=1e-2, atol=1e-7), "feats mismatch (bf16 ref)"

    # Loose check against the pure f32 module semantics.
    ref_logits, ref_feats = ta3n_reference(x, w_sp, b_sp, w_gy, b_gy, w_clf, b_clf)
    assert jnp.allclose(logits, ref_logits, rtol=1e-1, atol=1e-8), "logits mismatch (f32 ref)"
    assert jnp.allclose(feats_gy, ref_feats, rtol=1e-1, atol=1e-6), "feats mismatch (f32 ref)"

    print("KERNEL_OK")
</pallas_src>

<mosaic_0001>
module attributes {stable_mosaic.version = 11 : i64} {
  func.func @ta3n_kernel(%arg0: i32, %arg1: memref<128x128xbf16, #tpu.memory_space<vmem>>, %arg2: memref<128x128xbf16, #tpu.memory_space<vmem>>, %arg3: memref<1x128xf32, #tpu.memory_space<vmem>>, %arg4: memref<128x128xbf16, #tpu.memory_space<vmem>>, %arg5: memref<1x128xf32, #tpu.memory_space<vmem>>, %arg6: memref<128x128xbf16, #tpu.memory_space<vmem>>, %arg7: memref<1x128xf32, #tpu.memory_space<vmem>>, %arg8: memref<16x128xf32, #tpu.memory_space<vmem>>, %arg9: memref<16x128xf32, #tpu.memory_space<vmem>>) attributes {dimension_semantics = [#tpu.dimension_semantics<parallel>], iteration_bounds = array<i64: 1>, scalar_prefetch = 0 : i64, scratch_operands = 0 : i64, tpu.core_type = #tpu.core_type<tc>, window_params = [{transform_indices = @transform_0, window_bounds = array<i64: 128, 128>}, {pipeline_mode = #tpu.pipeline_mode<synchronous>, transform_indices = @transform_1, window_bounds = array<i64: 128, 128>}, {pipeline_mode = #tpu.pipeline_mode<synchronous>, transform_indices = @transform_2, window_bounds = array<i64: 1, 128>}, {pipeline_mode = #tpu.pipeline_mode<synchronous>, transform_indices = @transform_3, window_bounds = array<i64: 128, 128>}, {pipeline_mode = #tpu.pipeline_mode<synchronous>, transform_indices = @transform_4, window_bounds = array<i64: 1, 128>}, {pipeline_mode = #tpu.pipeline_mode<synchronous>, transform_indices = @transform_5, window_bounds = array<i64: 128, 128>}, {pipeline_mode = #tpu.pipeline_mode<synchronous>, transform_indices = @transform_6, window_bounds = array<i64: 1, 128>}, {transform_indices = @transform_7, window_bounds = array<i64: 16, 128>}, {transform_indices = @transform_8, window_bounds = array<i64: 16, 128>}]} {
    %c0 = arith.constant 0 : index
    %c0_0 = arith.constant 0 : index
    %0 = vector.load %arg1[%c0, %c0_0] : memref<128x128xbf16, #tpu.memory_space<vmem>>, vector<128x128xbf16>
    %c0_1 = arith.constant 0 : index
    %c0_2 = arith.constant 0 : index
    %1 = vector.load %arg2[%c0_1, %c0_2] : memref<128x128xbf16, #tpu.memory_space<vmem>>, vector<128x128xbf16>
    %cst = arith.constant dense<0.000000e+00> : vector<128x128xf32>
    %2 = tpu.matmul %0, %1, %cst {dimension_numbers = #tpu.dot_dimension_numbers<[1], [0], [0], [1], [0, 0, 1, 1], [], []>} : vector<128x128xbf16>, vector<128x128xbf16>, vector<128x128xf32> -> vector<128x128xf32>
    %c0_3 = arith.constant 0 : index
    %c0_4 = arith.constant 0 : index
    %3 = vector.load %arg3[%c0_3, %c0_4] : memref<1x128xf32, #tpu.memory_space<vmem>>, vector<1x128xf32>
    %4 = vector.broadcast %3 : vector<1x128xf32> to vector<128x128xf32>
    %5 = arith.addf %2, %4 : vector<128x128xf32>
    %cst_5 = arith.constant 0.000000e+00 : f32
    %6 = vector.broadcast %cst_5 : f32 to vector<128x128xf32>
    %7 = arith.maximumf %5, %6 : vector<128x128xf32>
    %8 = vector.shape_cast %7 : vector<128x128xf32> to vector<16x8x128xf32>
    %cst_6 = arith.constant dense<0.000000e+00> : vector<16x128xf32>
    %9 = vector.multi_reduction <add>, %8, %cst_6 [1] : vector<16x8x128xf32> to vector<16x128xf32>
    %cst_7 = arith.constant 1.250000e-01 : f32
    %10 = vector.broadcast %cst_7 : f32 to vector<16x128xf32>
    %11 = arith.mulf %9, %10 : vector<16x128xf32>
    %12 = arith.truncf %11 : vector<16x128xf32> to vector<16x128xbf16>
    %c0_8 = arith.constant 0 : index
    %c0_9 = arith.constant 0 : index
    %13 = vector.load %arg4[%c0_8, %c0_9] : memref<128x128xbf16, #tpu.memory_space<vmem>>, vector<128x128xbf16>
    %cst_10 = arith.constant dense<0.000000e+00> : vector<16x128xf32>
    %14 = tpu.matmul %12, %13, %cst_10 {dimension_numbers = #tpu.dot_dimension_numbers<[1], [0], [0], [1], [0, 0, 1, 1], [], []>} : vector<16x128xbf16>, vector<128x128xbf16>, vector<16x128xf32> -> vector<16x128xf32>
    %c0_11 = arith.constant 0 : index
    %c0_12 = arith.constant 0 : index
    %15 = vector.load %arg5[%c0_11, %c0_12] : memref<1x128xf32, #tpu.memory_space<vmem>>, vector<1x128xf32>
    %16 = vector.broadcast %15 : vector<1x128xf32> to vector<16x128xf32>
    %17 = arith.addf %14, %16 : vector<16x128xf32>
    %cst_13 = arith.constant 0.000000e+00 : f32
    %18 = vector.broadcast %cst_13 : f32 to vector<16x128xf32>
    %19 = arith.maximumf %17, %18 : vector<16x128xf32>
    %c0_14 = arith.constant 0 : index
    %c0_15 = arith.constant 0 : index
    %20 = vector.load %arg9[%c0_14, %c0_15] : memref<16x128xf32, #tpu.memory_space<vmem>>, vector<16x128xf32>
    tpu.vector_store %arg9[%c0_14, %c0_15], %19 {strides = array<i32>} : memref<16x128xf32, #tpu.memory_space<vmem>>, vector<16x128xf32>,
    %21 = arith.truncf %19 : vector<16x128xf32> to vector<16x128xbf16>
    %c0_16 = arith.constant 0 : index
    %c0_17 = arith.constant 0 : index
    %22 = vector.load %arg6[%c0_16, %c0_17] : memref<128x128xbf16, #tpu.memory_space<vmem>>, vector<128x128xbf16>
    %cst_18 = arith.constant dense<0.000000e+00> : vector<16x128xf32>
    %23 = tpu.matmul %21, %22, %cst_18 {dimension_numbers = #tpu.dot_dimension_numbers<[1], [0], [0], [1], [0, 0, 1, 1], [], []>} : vector<16x128xbf16>, vector<128x128xbf16>, vector<16x128xf32> -> vector<16x128xf32>
    %c0_19 = arith.constant 0 : index
    %c0_20 = arith.constant 0 : index
    %24 = vector.load %arg7[%c0_19, %c0_20] : memref<1x128xf32, #tpu.memory_space<vmem>>, vector<1x128xf32>
    %25 = vector.broadcast %24 : vector<1x128xf32> to vector<16x128xf32>
    %26 = arith.addf %23, %25 : vector<16x128xf32>
    %c0_21 = arith.constant 0 : index
    %c0_22 = arith.constant 0 : index
    %27 = vector.load %arg8[%c0_21, %c0_22] : memref<16x128xf32, #tpu.memory_space<vmem>>, vector<16x128xf32>
    tpu.vector_store %arg8[%c0_21, %c0_22], %26 {strides = array<i32>} : memref<16x128xf32, #tpu.memory_space<vmem>>, vector<16x128xf32>,
    return
  }
  func.func @transform_0(%arg0: i32) -> (i32, i32) {
    %c0_i32 = arith.constant 0 : i32
    %c0_i32_0 = arith.constant 0 : i32
    return %arg0, %c0_i32 : i32, i32
  }
  func.func @transform_1(%arg0: i32) -> (i32, i32) {
    %c0_i32 = arith.constant 0 : i32
    %c0_i32_0 = arith.constant 0 : i32
    %c0_i32_1 = arith.constant 0 : i32
    return %c0_i32, %c0_i32_0 : i32, i32
  }
  func.func @transform_2(%arg0: i32) -> (i32, i32) {
    %c0_i32 = arith.constant 0 : i32
    %c0_i32_0 = arith.constant 0 : i32
    %c0_i32_1 = arith.constant 0 : i32
    return %c0_i32, %c0_i32_0 : i32, i32
  }
  func.func @transform_3(%arg0: i32) -> (i32, i32) {
    %c0_i32 = arith.constant 0 : i32
    %c0_i32_0 = arith.constant 0 : i32
    %c0_i32_1 = arith.constant 0 : i32
    return %c0_i32, %c0_i32_0 : i32, i32
  }
  func.func @transform_4(%arg0: i32) -> (i32, i32) {
    %c0_i32 = arith.constant 0 : i32
    %c0_i32_0 = arith.constant 0 : i32
    %c0_i32_1 = arith.constant 0 : i32
    return %c0_i32, %c0_i32_0 : i32, i32
  }
  func.func @transform_5(%arg0: i32) -> (i32, i32) {
    %c0_i32 = arith.constant 0 : i32
    %c0_i32_0 = arith.constant 0 : i32
    %c0_i32_1 = arith.constant 0 : i32
    return %c0_i32, %c0_i32_0 : i32, i32
  }
  func.func @transform_6(%arg0: i32) -> (i32, i32) {
    %c0_i32 = arith.constant 0 : i32
    %c0_i32_0 = arith.constant 0 : i32
    %c0_i32_1 = arith.constant 0 : i32
    return %c0_i32, %c0_i32_0 : i32, i32
  }
  func.func @transform_7(%arg0: i32) -> (i32, i32) {
    %c0_i32 = arith.constant 0 : i32
    %c0_i32_0 = arith.constant 0 : i32
    return %arg0, %c0_i32 : i32, i32
  }
  func.func @transform_8(%arg0: i32) -> (i32, i32) {
    %c0_i32 = arith.constant 0 : i32
    %c0_i32_0 = arith.constant 0 : i32
    return %arg0, %c0_i32 : i32, i32
  }
}

</mosaic_0001>

<llo_original>
// kernel: tpu_custom_call.1
$region0: #{tpu_custom_call.1}
  #allocation0 [shape = 'u32[]', space=smem, size = 0x4, offset = 0x4, fixed_abs, tag = 'smem constant byte address 0x4 - core index']
  #allocation1 [shape = 'u32[144,128]{1,0:T(1,128)}', space=vmem, size = 0x12000, scoped, tag = 'internal scratch']
  %s0 = inlined_call_operand.hbm [shape: bf16[128,128], index: 0, kind: input, shape index: {}]
  %s1 = inlined_call_operand.hbm [shape: bf16[128,128], index: 1, kind: input, shape index: {}]
  %s2 = inlined_call_operand.vmem [shape: f32[1,128], index: 2, kind: input, shape index: {}]
  %s3 = inlined_call_operand.hbm [shape: bf16[128,128], index: 3, kind: input, shape index: {}]
  %s4 = inlined_call_operand.vmem [shape: f32[1,128], index: 4, kind: input, shape index: {}]
  %s5 = inlined_call_operand.hbm [shape: bf16[128,128], index: 5, kind: input, shape index: {}]
  %s6 = inlined_call_operand.vmem [shape: f32[1,128], index: 6, kind: input, shape index: {}]
  %s7 = inlined_call_operand.hbm [shape: f32[16,128], index: 7, kind: output, shape index: {0}]
  %s8 = inlined_call_operand.hbm [shape: f32[16,128], index: 8, kind: output, shape index: {1}]
  %9 = xla_tuple %s7, %s8
  %s10 = sld [smem:[#allocation0]]
  $region62: #{tpu_custom_call.1} parent=0
    _
  %s12 = ssub.s32 1, %s10
  %s13 = scalar_select 0, %s12, %s10
  $region1: #{tpu_custom_call.1} parent=0
    #allocation2 [shape = 'u8[32768]{0}', space=vmem, size = 0x8000, scoped, tag = 'input window, operand 0, single buffered']
    #allocation3 [shape = 's32[1]{0}', space=sflag, size = 0x4, scoped, tag = 'scoped memory for tpu_custom_call.1']
    #allocation4 [shape = 's32[1]{0}', space=sflag, size = 0x4, scoped, tag = 'scoped memory for tpu_custom_call.1']
    #allocation5 [shape = 'u8[32768]{0}', space=vmem, size = 0x8000, scoped, tag = 'input window, operand 1, single buffered']
    #allocation6 [shape = 's32[1]{0}', space=sflag, size = 0x4, scoped, tag = 'scoped memory for tpu_custom_call.1']
    #allocation7 [shape = 'u8[32768]{0}', space=vmem, size = 0x8000, scoped, tag = 'input window, operand 3, single buffered']
    #allocation8 [shape = 'u8[32768]{0}', space=vmem, size = 0x8000, scoped, tag = 'input window, operand 5, single buffered']
    #allocation9 [shape = 's32[1]{0}', space=sflag, size = 0x4, scoped, tag = 'scoped memory for tpu_custom_call.1']
    #allocation10 [shape = 'u8[8192]{0}', space=vmem, size = 0x2000, scoped, tag = 'output window, operand 0, single buffered']
    #allocation11 [shape = 'u8[8192]{0}', space=vmem, size = 0x2000, scoped, tag = 'output window, operand 1, single buffered']
    #allocation12 [shape = 's32[1]{0}', space=sflag, size = 0x4, scoped, tag = 'scoped memory for tpu_custom_call.1']
    %14 = vsyncpa [#allocation3], 0
    %15 = vsyncpa [#allocation6], 0
    %16 = vsyncpa [#allocation9], 0
    %17 = vsyncpa [#allocation4], 0
    %18 = vsyncpa [#allocation12], 0
    // Predicated region
    $region2: #{tpu_custom_call.1} parent=1 // pred_check
      _
    $region3: #{tpu_custom_call.1} parent=1 // pred_check_branch
      %20 = sbr.rel (0) target = $region5
    $region4: #{tpu_custom_call.1} parent=1 // pred_region
      %s22 = ssub.s32 1024, 1024
      %23 = vsyncadd [#allocation3], %s22
      %s24 = sshll.u32 [#allocation2], 4
      %s25 = int_to_ptr.vmem [resolvable:$true] %s24
      %30 = dma.hbm_to_vmem [thread:$0]  %s0, 1024, %s25, [#allocation3], 64, 64, 4
    $region5: #{tpu_custom_call.1} parent=1 // pred_fallthru
      _
    // Predicated region
    $region6: #{tpu_custom_call.1} parent=1 // pred_check
      _
    $region7: #{tpu_custom_call.1} parent=1 // pred_check_branch
      %32 = sbr.rel (0) target = $region9
    $region8: #{tpu_custom_call.1} parent=1 // pred_region
      %s34 = ssub.s32 1024, 1024
      %35 = vsyncadd [#allocation6], %s34
      %s36 = sshll.u32 [#allocation5], 4
      %s37 = int_to_ptr.vmem [resolvable:$true] %s36
      %42 = dma.hbm_to_vmem [thread:$0]  %s1, 1024, %s37, [#allocation6], 64, 64, 4
    $region9: #{tpu_custom_call.1} parent=1 // pred_fallthru
      _
    // Predicated region
    $region10: #{tpu_custom_call.1} parent=1 // pred_check
      _
    $region11: #{tpu_custom_call.1} parent=1 // pred_check_branch
      %44 = sbr.rel (0) target = $region13
    $region12: #{tpu_custom_call.1} parent=1 // pred_region
      _
    $region13: #{tpu_custom_call.1} parent=1 // pred_fallthru
      _
    // Predicated region
    $region14: #{tpu_custom_call.1} parent=1 // pred_check
      _
    $region15: #{tpu_custom_call.1} parent=1 // pred_check_branch
      %46 = sbr.rel (0) target = $region17
    $region16: #{tpu_custom_call.1} parent=1 // pred_region
      %s48 = ssub.s32 1024, 1024
      %49 = vsyncadd [#allocation6], %s48
      %s50 = sshll.u32 [#allocation7], 4
      %s51 = int_to_ptr.vmem [resolvable:$true] %s50
      %56 = dma.hbm_to_vmem [thread:$0]  %s3, 1024, %s51, [#allocation6], 64, 64, 4
    $region17: #{tpu_custom_call.1} parent=1 // pred_fallthru
      _
    // Predicated region
    $region18: #{tpu_custom_call.1} parent=1 // pred_check
      _
    $region19: #{tpu_custom_call.1} parent=1 // pred_check_branch
      %58 = sbr.rel (0) target = $region21
    $region20: #{tpu_custom_call.1} parent=1 // pred_region
      _
    $region21: #{tpu_custom_call.1} parent=1 // pred_fallthru
      _
    // Predicated region
    $region22: #{tpu_custom_call.1} parent=1 // pred_check
      _
    $region23: #{tpu_custom_call.1} parent=1 // pred_check_branch
      %60 = sbr.rel (0) target = $region25
    $region24: #{tpu_custom_call.1} parent=1 // pred_region
      %s62 = ssub.s32 1024, 1024
      %63 = vsyncadd [#allocation9], %s62
      %s64 = sshll.u32 [#allocation8], 4
      %s65 = int_to_ptr.vmem [resolvable:$true] %s64
      %70 = dma.hbm_to_vmem [thread:$0]  %s5, 1024, %s65, [#allocation9], 64, 64, 4
    $region25: #{tpu_custom_call.1} parent=1 // pred_fallthru
      _
    // Predicated region
    $region26: #{tpu_custom_call.1} parent=1 // pred_check
      _
    $region27: #{tpu_custom_call.1} parent=1 // pred_check_branch
      %72 = sbr.rel (0) target = $region29
    $region28: #{tpu_custom_call.1} parent=1 // pred_region
      _
    $region29: #{tpu_custom_call.1} parent=1 // pred_fallthru
      _
    // Predicated region
    $region30: #{tpu_custom_call.1} parent=1 // pred_check
      _
    $region31: #{tpu_custom_call.1} parent=1 // pred_check_branch
      %74 = sbr.rel (0) target = $region33
    $region32: #{tpu_custom_call.1} parent=1 // pred_region
      %75 = dma.done [#allocation3], 1024
    $region33: #{tpu_custom_call.1} parent=1 // pred_fallthru
      _
    // Predicated region
    $region34: #{tpu_custom_call.1} parent=1 // pred_check
      _
    $region35: #{tpu_custom_call.1} parent=1 // pred_check_branch
      %77 = sbr.rel (0) target = $region37
    $region36: #{tpu_custom_call.1} parent=1 // pred_region
      %78 = dma.done [#allocation6], 1024
    $region37: #{tpu_custom_call.1} parent=1 // pred_fallthru
      _
    // Predicated region
    $region38: #{tpu_custom_call.1} parent=1 // pred_check
      _
    $region39: #{tpu_custom_call.1} parent=1 // pred_check_branch
      %80 = sbr.rel (0) target = $region41
    $region40: #{tpu_custom_call.1} parent=1 // pred_region
      %81 = dma.done [#allocation6], 1024
    $region41: #{tpu_custom_call.1} parent=1 // pred_fallthru
      _
    // Predicated region
    $region42: #{tpu_custom_call.1} parent=1 // pred_check
      _
    $region43: #{tpu_custom_call.1} parent=1 // pred_check_branch
      %83 = sbr.rel (0) target = $region45
    $region44: #{tpu_custom_call.1} parent=1 // pred_region
      %84 = dma.done [#allocation9], 1024
    $region45: #{tpu_custom_call.1} parent=1 // pred_fallthru
      _
    %v86 = vld [vmem:[#allocation2] sm:$0xf]
    %v87 = vld [vmem:[#allocation2 + $0x4] sm:$0xf]
    %v88 = vld [vmem:[#allocation2 + $0x8] sm:$0xf]
    %v89 = vld [vmem:[#allocation2 + $0xc] sm:$0xf]
    %v90 = vld [vmem:[#allocation2 + $0x10] sm:$0xf]
    %v91 = vld [vmem:[#allocation2 + $0x14] sm:$0xf]
    %v92 = vld [vmem:[#allocation2 + $0x18] sm:$0xf]
    %v93 = vld [vmem:[#allocation2 + $0x1c] sm:$0xf]
    %v94 = vld [vmem:[#allocation2 + $0x20] sm:$0xf]
    %v95 = vld [vmem:[#allocation2 + $0x24] sm:$0xf]
    %v96 = vld [vmem:[#allocation2 + $0x28] sm:$0xf]
    %v97 = vld [vmem:[#allocation2 + $0x2c] sm:$0xf]
    %v98 = vld [vmem:[#allocation2 + $0x30] sm:$0xf]
    %v99 = vld [vmem:[#allocation2 + $0x34] sm:$0xf]
    %v100 = vld [vmem:[#allocation2 + $0x38] sm:$0xf]
    %v101 = vld [vmem:[#allocation2 + $0x3c] sm:$0xf]
    %v102 = vld [vmem:[#allocation5] sm:$0xf]
    %v103 = vld [vmem:[#allocation5 + $0x4] sm:$0xf]
    %v104 = vld [vmem:[#allocation5 + $0x8] sm:$0xf]
    %v105 = vld [vmem:[#allocation5 + $0xc] sm:$0xf]
    %v106 = vld [vmem:[#allocation5 + $0x10] sm:$0xf]
    %v107 = vld [vmem:[#allocation5 + $0x14] sm:$0xf]
    %v108 = vld [vmem:[#allocation5 + $0x18] sm:$0xf]
    %v109 = vld [vmem:[#allocation5 + $0x1c] sm:$0xf]
    %v110 = vld [vmem:[#allocation5 + $0x20] sm:$0xf]
    %v111 = vld [vmem:[#allocation5 + $0x24] sm:$0xf]
    %v112 = vld [vmem:[#allocation5 + $0x28] sm:$0xf]
    %v113 = vld [vmem:[#allocation5 + $0x2c] sm:$0xf]
    %v114 = vld [vmem:[#allocation5 + $0x30] sm:$0xf]
    %v115 = vld [vmem:[#allocation5 + $0x34] sm:$0xf]
    %v116 = vld [vmem:[#allocation5 + $0x38] sm:$0xf]
    %v117 = vld [vmem:[#allocation5 + $0x3c] sm:$0xf]
    %v118 = vld [vmem:[%s2] sm:$0x1]
    %v120 = vlaneseq
    %v121 = vshrl.u32 %v120, 7
    %v122 = vsub.s32 0, %v121
    %v123 = vrot.slane %v118, %v122
    %v141 = vunpack.c.l.b16 %v86
    %v142 = vunpack.c.l.b16 %v87
    %v143 = vunpack.c.l.b16 %v88
    %v144 = vunpack.c.l.b16 %v89
    %v145 = vunpack.c.l.b16 %v90
    %v146 = vunpack.c.l.b16 %v91
    %v147 = vunpack.c.l.b16 %v92
    %v148 = vunpack.c.l.b16 %v93
    %v149 = vunpack.c.l.b16 %v94
    %v150 = vunpack.c.l.b16 %v95
    %v151 = vunpack.c.l.b16 %v96
    %v152 = vunpack.c.l.b16 %v97
    %v153 = vunpack.c.l.b16 %v98
    %v154 = vunpack.c.l.b16 %v99
    %v155 = vunpack.c.l.b16 %v100
    %v156 = vunpack.c.l.b16 %v101
    %v157 = vpack.c.b16 %v142, %v141
    %v158 = vpack.c.b16 %v144, %v143
    %v159 = vpack.c.b16 %v146, %v145
    %v160 = vpack.c.b16 %v148, %v147
    %v161 = vpack.c.b16 %v150, %v149
    %v162 = vpack.c.b16 %v152, %v151
    %v163 = vpack.c.b16 %v154, %v153
    %v164 = vpack.c.b16 %v156, %v155
    %v189 = vunpack.c.l.b16 %v102
    %v190 = vunpack.c.l.b16 %v103
    %v191 = vunpack.c.l.b16 %v104
    %v192 = vunpack.c.l.b16 %v105
    %v193 = vunpack.c.l.b16 %v106
    %v194 = vunpack.c.l.b16 %v107
    %v195 = vunpack.c.l.b16 %v108
    %v196 = vunpack.c.l.b16 %v109
    %v197 = vunpack.c.l.b16 %v110
    %v198 = vunpack.c.l.b16 %v111
    %v199 = vunpack.c.l.b16 %v112
    %v200 = vunpack.c.l.b16 %v113
    %v201 = vunpack.c.l.b16 %v114
    %v202 = vunpack.c.l.b16 %v115
    %v203 = vunpack.c.l.b16 %v116
    %v204 = vunpack.c.l.b16 %v117
    %v205 = vpack.c.b16 %v190, %v189
    %v206 = vpack.c.b16 %v192, %v191
    %v207 = vpack.c.b16 %v194, %v193
    %v208 = vpack.c.b16 %v196, %v195
    %v209 = vpack.c.b16 %v198, %v197
    %v210 = vpack.c.b16 %v200, %v199
    %v211 = vpack.c.b16 %v202, %v201
    %v212 = vpack.c.b16 %v204, %v203
    %221 = vmatprep.subr.bf16.mxu0 0
    %222 = vmatpush1.bf16.msra.mxu0 %v205
    %223 = vmatprep.subr.bf16.mxu0 0
    %224 = vmatpush1.bf16.msra.mxu0 %v206
    %225 = vmatprep.subr.bf16.mxu0 0
    %226 = vmatpush1.bf16.msra.mxu0 %v207
    %227 = vmatprep.subr.bf16.mxu0 0
    %228 = vmatpush1.bf16.msra.mxu0 %v208
    %229 = vmatprep.subr.bf16.mxu0 0
    %230 = vmatpush1.bf16.msra.mxu0 %v209
    %231 = vmatprep.subr.bf16.mxu0 0
    %232 = vmatpush1.bf16.msra.mxu0 %v210
    %233 = vmatprep.subr.bf16.mxu0 0
    %234 = vmatpush1.bf16.msra.mxu0 %v211
    %235 = vmatprep.subr.bf16.mxu0 0
    %236 = vmatpush1.bf16.msra.mxu0 %v212
    %237 = vmatprep.subr.bf16.mxu0 0
    %238 = vmatpush1.bf16.msra.mxu0 0
    %239 = vmatprep.subr.bf16.mxu0 0
    %240 = vmatpush1.bf16.msra.mxu0 0
    %241 = vmatprep.subr.bf16.mxu0 0
    %242 = vmatpush1.bf16.msra.mxu0 0
    %243 = vmatprep.subr.bf16.mxu0 0
    %244 = vmatpush1.bf16.msra.mxu0 0
    %245 = vmatprep.subr.bf16.mxu0 0
    %246 = vmatpush1.bf16.msra.mxu0 0
    %247 = vmatprep.subr.bf16.mxu0 0
    %248 = vmatpush1.bf16.msra.mxu0 0
    %249 = vmatprep.subr.bf16.mxu0 0
    %250 = vmatpush1.bf16.msra.mxu0 0
    %251 = vmatprep.subr.bf16.mxu0 0
    %252 = vmatpush1.bf16.msra.mxu0 0
    %253 = vmatprep.mubr.bf16.mxu0 0
    %254 = vmatmul.mubr.bf16.gmra.mrb[0].mxu0 %v157
    %v255 = vpop.f32.mrb[0].mxu0
    %v256 = vadd.f32 %v123, %v255
    %v257 = vpop.f32.mrb[0].mxu0
    %v258 = vpop.f32.mrb[0].mxu0
    %v259 = vadd.f32 %v123, %v258
    %v260 = vpop.f32.mrb[0].mxu0
    %261 = vmatprep.mubr.bf16.mxu0 0
    %262 = vmatmul.mubr.bf16.gmra.mrb[0].mxu0 %v158
    %v263 = vpop.f32.mrb[0].mxu0
    %v264 = vadd.f32 %v123, %v263
    %v265 = vpop.f32.mrb[0].mxu0
    %v266 = vpop.f32.mrb[0].mxu0
    %v267 = vadd.f32 %v123, %v266
    %v268 = vpop.f32.mrb[0].mxu0
    %269 = vmatprep.mubr.bf16.mxu0 0
    %270 = vmatmul.mubr.bf16.gmra.mrb[0].mxu0 %v159
    %v271 = vpop.f32.mrb[0].mxu0
    %v272 = vadd.f32 %v123, %v271
    %v273 = vpop.f32.mrb[0].mxu0
    %v274 = vpop.f32.mrb[0].mxu0
    %v275 = vadd.f32 %v123, %v274
    %v276 = vpop.f32.mrb[0].mxu0
    %277 = vmatprep.mubr.bf16.mxu0 0
    %278 = vmatmul.mubr.bf16.gmra.mrb[0].mxu0 %v160
    %v279 = vpop.f32.mrb[0].mxu0
    %v280 = vadd.f32 %v123, %v279
    %v281 = vpop.f32.mrb[0].mxu0
    %v282 = vpop.f32.mrb[0].mxu0
    %v283 = vadd.f32 %v123, %v282
    %v284 = vpop.f32.mrb[0].mxu0
    %285 = vmatprep.mubr.bf16.mxu0 0
    %286 = vmatmul.mubr.bf16.gmra.mrb[0].mxu0 %v161
    %v287 = vpop.f32.mrb[0].mxu0
    %v288 = vadd.f32 %v123, %v287
    %v289 = vpop.f32.mrb[0].mxu0
    %v290 = vpop.f32.mrb[0].mxu0
    %v291 = vadd.f32 %v123, %v290
    %v292 = vpop.f32.mrb[0].mxu0
    %293 = vmatprep.mubr.bf16.mxu0 0
    %294 = vmatmul.mubr.bf16.gmra.mrb[0].mxu0 %v162
    %v295 = vpop.f32.mrb[0].mxu0
    %v296 = vadd.f32 %v123, %v295
    %v297 = vpop.f32.mrb[0].mxu0
    %v298 = vpop.f32.mrb[0].mxu0
    %v299 = vadd.f32 %v123, %v298
    %v300 = vpop.f32.mrb[0].mxu0
    %301 = vmatprep.mubr.bf16.mxu0 0
    %302 = vmatmul.mubr.bf16.gmra.mrb[0].mxu0 %v163
    %v303 = vpop.f32.mrb[0].mxu0
    %v304 = vadd.f32 %v123, %v303
    %v305 = vpop.f32.mrb[0].mxu0
    %v306 = vpop.f32.mrb[0].mxu0
    %v307 = vadd.f32 %v123, %v306
    %v308 = vpop.f32.mrb[0].mxu0
    %309 = vmatprep.mubr.bf16.mxu0 0
    %310 = vmatmul.mubr.bf16.gmra.mrb[0].mxu0 %v164
    %v311 = vpop.f32.mrb[0].mxu0
    %v312 = vadd.f32 %v123, %v311
    %v313 = vpop.f32.mrb[0].mxu0
    %v314 = vpop.f32.mrb[0].mxu0
    %v315 = vadd.f32 %v123, %v314
    %v316 = vpop.f32.mrb[0].mxu0
    %317 = vdwg.mxu0
    %v318 = vmax.f32 %v256, 0.0
    %v319 = vmax.f32 %v259, 0.0
    %v320 = vmax.f32 %v264, 0.0
    %v321 = vmax.f32 %v267, 0.0
    %v322 = vmax.f32 %v272, 0.0
    %v323 = vmax.f32 %v275, 0.0
    %v324 = vmax.f32 %v280, 0.0
    %v325 = vmax.f32 %v283, 0.0
    %v326 = vmax.f32 %v288, 0.0
    %v327 = vmax.f32 %v291, 0.0
    %v328 = vmax.f32 %v296, 0.0
    %v329 = vmax.f32 %v299, 0.0
    %v330 = vmax.f32 %v304, 0.0
    %v331 = vmax.f32 %v307, 0.0
    %v332 = vmax.f32 %v312, 0.0
    %v333 = vmax.f32 %v315, 0.0
    %v334 = vrot.slane %v318, 4
    %v335 = vadd.f32 %v318, %v334
    %v336 = vrot.slane %v335, 2
    %v337 = vadd.f32 %v335, %v336
    %v338 = vrot.slane %v337, 1
    %v339 = vadd.f32 %v337, %v338
    %v340 = vrot.slane %v319, 4
    %v341 = vadd.f32 %v319, %v340
    %v342 = vrot.slane %v341, 2
    %v343 = vadd.f32 %v341, %v342
    %v344 = vrot.slane %v343, 1
    %v345 = vadd.f32 %v343, %v344
    %v346 = vrot.slane %v320, 4
    %v347 = vadd.f32 %v320, %v346
    %v348 = vrot.slane %v347, 2
    %v349 = vadd.f32 %v347, %v348
    %v350 = vrot.slane %v349, 1
    %v351 = vadd.f32 %v349, %v350
    %v352 = vrot.slane %v321, 4
    %v353 = vadd.f32 %v321, %v352
    %v354 = vrot.slane %v353, 2
    %v355 = vadd.f32 %v353, %v354
    %v356 = vrot.slane %v355, 1
    %v357 = vadd.f32 %v355, %v356
    %v358 = vrot.slane %v322, 4
    %v359 = vadd.f32 %v322, %v358
    %v360 = vrot.slane %v359, 2
    %v361 = vadd.f32 %v359, %v360
    %v362 = vrot.slane %v361, 1
    %v363 = vadd.f32 %v361, %v362
    %v364 = vrot.slane %v323, 4
    %v365 = vadd.f32 %v323, %v364
    %v366 = vrot.slane %v365, 2
    %v367 = vadd.f32 %v365, %v366
    %v368 = vrot.slane %v367, 1
    %v369 = vadd.f32 %v367, %v368
    %v370 = vrot.slane %v324, 4
    %v371 = vadd.f32 %v324, %v370
    %v372 = vrot.slane %v371, 2
    %v373 = vadd.f32 %v371, %v372
    %v374 = vrot.slane %v373, 1
    %v375 = vadd.f32 %v373, %v374
    %v376 = vrot.slane %v325, 4
    %v377 = vadd.f32 %v325, %v376
    %v378 = vrot.slane %v377, 2
    %v379 = vadd.f32 %v377, %v378
    %v380 = vrot.slane %v379, 1
    %v381 = vadd.f32 %v379, %v380
    %v382 = vrot.slane %v326, 4
    %v383 = vadd.f32 %v326, %v382
    %v384 = vrot.slane %v383, 2
    %v385 = vadd.f32 %v383, %v384
    %v386 = vrot.slane %v385, 1
    %v387 = vadd.f32 %v385, %v386
    %v388 = vrot.slane %v327, 4
    %v389 = vadd.f32 %v327, %v388
    %v390 = vrot.slane %v389, 2
    %v391 = vadd.f32 %v389, %v390
    %v392 = vrot.slane %v391, 1
    %v393 = vadd.f32 %v391, %v392
    %v394 = vrot.slane %v328, 4
    %v395 = vadd.f32 %v328, %v394
    %v396 = vrot.slane %v395, 2
    %v397 = vadd.f32 %v395, %v396
    %v398 = vrot.slane %v397, 1
    %v399 = vadd.f32 %v397, %v398
    %v400 = vrot.slane %v329, 4
    %v401 = vadd.f32 %v329, %v400
    %v402 = vrot.slane %v401, 2
    %v403 = vadd.f32 %v401, %v402
    %v404 = vrot.slane %v403, 1
    %v405 = vadd.f32 %v403, %v404
    %v406 = vrot.slane %v330, 4
    %v407 = vadd.f32 %v330, %v406
    %v408 = vrot.slane %v407, 2
    %v409 = vadd.f32 %v407, %v408
    %v410 = vrot.slane %v409, 1
    %v411 = vadd.f32 %v409, %v410
    %v412 = vrot.slane %v331, 4
    %v413 = vadd.f32 %v331, %v412
    %v414 = vrot.slane %v413, 2
    %v415 = vadd.f32 %v413, %v414
    %v416 = vrot.slane %v415, 1
    %v417 = vadd.f32 %v415, %v416
    %v418 = vrot.slane %v332, 4
    %v419 = vadd.f32 %v332, %v418
    %v420 = vrot.slane %v419, 2
    %v421 = vadd.f32 %v419, %v420
    %v422 = vrot.slane %v421, 1
    %v423 = vadd.f32 %v421, %v422
    %v424 = vrot.slane %v333, 4
    %v425 = vadd.f32 %v333, %v424
    %v426 = vrot.slane %v425, 2
    %v427 = vadd.f32 %v425, %v426
    %v428 = vrot.slane %v427, 1
    %v429 = vadd.f32 %v427, %v428
    %v430 = vmul.f32 %v339, 0.125
    %v431 = vmul.f32 %v345, 0.125
    %v432 = vmul.f32 %v351, 0.125
    %v433 = vmul.f32 %v357, 0.125
    %v434 = vmul.f32 %v363, 0.125
    %v435 = vmul.f32 %v369, 0.125
    %v436 = vmul.f32 %v375, 0.125
    %v437 = vmul.f32 %v381, 0.125
    %v438 = vmul.f32 %v387, 0.125
    %v439 = vmul.f32 %v393, 0.125
    %v440 = vmul.f32 %v399, 0.125
    %v441 = vmul.f32 %v405, 0.125
    %v442 = vmul.f32 %v411, 0.125
    %v443 = vmul.f32 %v417, 0.125
    %v444 = vmul.f32 %v423, 0.125
    %v445 = vmul.f32 %v429, 0.125
    %v446 = vpack.c.bf16 %v430, %v430
    %v447 = vpack.c.bf16 %v431, %v431
    %v448 = vpack.c.bf16 %v432, %v432
    %v449 = vpack.c.bf16 %v433, %v433
    %v450 = vpack.c.bf16 %v434, %v434
    %v451 = vpack.c.bf16 %v435, %v435
    %v452 = vpack.c.bf16 %v436, %v436
    %v453 = vpack.c.bf16 %v437, %v437
    %v454 = vpack.c.bf16 %v438, %v438
    %v455 = vpack.c.bf16 %v439, %v439
    %v456 = vpack.c.bf16 %v440, %v440
    %v457 = vpack.c.bf16 %v441, %v441
    %v458 = vpack.c.bf16 %v442, %v442
    %v459 = vpack.c.bf16 %v443, %v443
    %v460 = vpack.c.bf16 %v444, %v444
    %v461 = vpack.c.bf16 %v445, %v445
    %v462 = vld [vmem:[#allocation7] sm:$0xf]
    %v463 = vld [vmem:[#allocation7 + $0x4] sm:$0xf]
    %v464 = vld [vmem:[#allocation7 + $0x8] sm:$0xf]
    %v465 = vld [vmem:[#allocation7 + $0xc] sm:$0xf]
    %v466 = vld [vmem:[#allocation7 + $0x10] sm:$0xf]
    %v467 = vld [vmem:[#allocation7 + $0x14] sm:$0xf]
    %v468 = vld [vmem:[#allocation7 + $0x18] sm:$0xf]
    %v469 = vld [vmem:[#allocation7 + $0x1c] sm:$0xf]
    %v470 = vld [vmem:[#allocation7 + $0x20] sm:$0xf]
    %v471 = vld [vmem:[#allocation7 + $0x24] sm:$0xf]
    %v472 = vld [vmem:[#allocation7 + $0x28] sm:$0xf]
    %v473 = vld [vmem:[#allocation7 + $0x2c] sm:$0xf]
    %v474 = vld [vmem:[#allocation7 + $0x30] sm:$0xf]
    %v475 = vld [vmem:[#allocation7 + $0x34] sm:$0xf]
    %v476 = vld [vmem:[#allocation7 + $0x38] sm:$0xf]
    %v477 = vld [vmem:[#allocation7 + $0x3c] sm:$0xf]
    %v478 = vld [vmem:[%s4] sm:$0x1]
    %v480 = vlaneseq
    %v481 = vshrl.u32 %v480, 7
    %v482 = vsub.s32 0, %v481
    %v483 = vrot.slane %v478, %v482
    %v501 = vunpack.c.l.b16 %v446
    %v502 = vunpack.c.l.b16 %v447
    %v503 = vunpack.c.l.b16 %v448
    %v504 = vunpack.c.l.b16 %v449
    %v505 = vunpack.c.l.b16 %v450
    %v506 = vunpack.c.l.b16 %v451
    %v507 = vunpack.c.l.b16 %v452
    %v508 = vunpack.c.l.b16 %v453
    %v509 = vunpack.c.l.b16 %v454
    %v510 = vunpack.c.l.b16 %v455
    %v511 = vunpack.c.l.b16 %v456
    %v512 = vunpack.c.l.b16 %v457
    %v513 = vunpack.c.l.b16 %v458
    %v514 = vunpack.c.l.b16 %v459
    %v515 = vunpack.c.l.b16 %v460
    %v516 = vunpack.c.l.b16 %v461
    %vm517 = vcmask 1041409
    %v518 = vsel %vm517, %v502, %v501
    %vm519 = vcmask 1042434
    %v520 = vsel %vm519, %v503, %v518
    %vm521 = vcmask 1043459
    %v522 = vsel %vm521, %v504, %v520
    %vm523 = vcmask 1044484
    %v524 = vsel %vm523, %v505, %v522
    %vm525 = vcmask 1045509
    %v526 = vsel %vm525, %v506, %v524
    %vm527 = vcmask 1046534
    %v528 = vsel %vm527, %v507, %v526
    %vm529 = vcmask 1047559
    %v530 = vsel %vm529, %v508, %v528
    %v531 = vsel %vm517, %v510, %v509
    %v532 = vsel %vm519, %v511, %v531
    %v533 = vsel %vm521, %v512, %v532
    %v534 = vsel %vm523, %v513, %v533
    %v535 = vsel %vm525, %v514, %v534
    %v536 = vsel %vm527, %v515, %v535
    %v537 = vsel %vm529, %v516, %v536
    %v538 = vpack.c.b16 %v537, %v530
    %v556 = vunpack.c.l.b16 %v462
    %v557 = vunpack.c.l.b16 %v463
    %v558 = vunpack.c.l.b16 %v464
    %v559 = vunpack.c.l.b16 %v465
    %v560 = vunpack.c.l.b16 %v466
    %v561 = vunpack.c.l.b16 %v467
    %v562 = vunpack.c.l.b16 %v468
    %v563 = vunpack.c.l.b16 %v469
    %v564 = vunpack.c.l.b16 %v470
    %v565 = vunpack.c.l.b16 %v471
    %v566 = vunpack.c.l.b16 %v472
    %v567 = vunpack.c.l.b16 %v473
    %v568 = vunpack.c.l.b16 %v474
    %v569 = vunpack.c.l.b16 %v475
    %v570 = vunpack.c.l.b16 %v476
    %v571 = vunpack.c.l.b16 %v477
    %v572 = vpack.c.b16 %v557, %v556
    %v573 = vpack.c.b16 %v559, %v558
    %v574 = vpack.c.b16 %v561, %v560
    %v575 = vpack.c.b16 %v563, %v562
    %v576 = vpack.c.b16 %v565, %v564
    %v577 = vpack.c.b16 %v567, %v566
    %v578 = vpack.c.b16 %v569, %v568
    %v579 = vpack.c.b16 %v571, %v570
    %588 = vmatprep.subr.bf16.mxu0 0
    %589 = vmatpush1.bf16.msra.mxu0 %v572
    %590 = vmatprep.subr.bf16.mxu0 0
    %591 = vmatpush1.bf16.msra.mxu0 %v573
    %592 = vmatprep.subr.bf16.mxu0 0
    %593 = vmatpush1.bf16.msra.mxu0 %v574
    %594 = vmatprep.subr.bf16.mxu0 0
    %595 = vmatpush1.bf16.msra.mxu0 %v575
    %596 = vmatprep.subr.bf16.mxu0 0
    %597 = vmatpush1.bf16.msra.mxu0 %v576
    %598 = vmatprep.subr.bf16.mxu0 0
    %599 = vmatpush1.bf16.msra.mxu0 %v577
    %600 = vmatprep.subr.bf16.mxu0 0
    %601 = vmatpush1.bf16.msra.mxu0 %v578
    %602 = vmatprep.subr.bf16.mxu0 0
    %603 = vmatpush1.bf16.msra.mxu0 %v579
    %604 = vmatprep.subr.bf16.mxu0 0
    %605 = vmatpush1.bf16.msra.mxu0 0
    %606 = vmatprep.subr.bf16.mxu0 0
    %607 = vmatpush1.bf16.msra.mxu0 0
    %608 = vmatprep.subr.bf16.mxu0 0
    %609 = vmatpush1.bf16.msra.mxu0 0
    %610 = vmatprep.subr.bf16.mxu0 0
    %611 = vmatpush1.bf16.msra.mxu0 0
    %612 = vmatprep.subr.bf16.mxu0 0
    %613 = vmatpush1.bf16.msra.mxu0 0
    %614 = vmatprep.subr.bf16.mxu0 0
    %615 = vmatpush1.bf16.msra.mxu0 0
    %616 = vmatprep.subr.bf16.mxu0 0
    %617 = vmatpush1.bf16.msra.mxu0 0
    %618 = vmatprep.subr.bf16.mxu0 0
    %619 = vmatpush1.bf16.msra.mxu0 0
    %620 = vmatprep.mubr.bf16.mxu0 0
    %621 = vmatmul.mubr.bf16.gmra.mrb[0].mxu0 %v538
    %v622 = vpop.f32.mrb[0].mxu0
    %v623 = vadd.f32 %v483, %v622
    %v624 = vpop.f32.mrb[0].mxu0
    %v625 = vpop.f32.mrb[0].mxu0
    %v626 = vadd.f32 %v483, %v625
    %v627 = vpop.f32.mrb[0].mxu0
    %628 = vdwg.mxu0
    %v629 = vmax.f32 %v623, 0.0
    %v630 = vmax.f32 %v626, 0.0
    %631 = vst [vmem:[#allocation11] sm:$0xff] %v629
    %632 = vst [vmem:[#allocation11 + $0x8] sm:$0xff] %v630
    %v633 = vpack.c.bf16 %v630, %v629
    %v634 = vld [vmem:[#allocation8] sm:$0xf]
    %v635 = vld [vmem:[#allocation8 + $0x4] sm:$0xf]
    %v636 = vld [vmem:[#allocation8 + $0x8] sm:$0xf]
    %v637 = vld [vmem:[#allocation8 + $0xc] sm:$0xf]
    %v638 = vld [vmem:[#allocation8 + $0x10] sm:$0xf]
    %v639 = vld [vmem:[#allocation8 + $0x14] sm:$0xf]
    %v640 = vld [vmem:[#allocation8 + $0x18] sm:$0xf]
    %v641 = vld [vmem:[#allocation8 + $0x1c] sm:$0xf]
    %v642 = vld [vmem:[#allocation8 + $0x20] sm:$0xf]
    %v643 = vld [vmem:[#allocation8 + $0x24] sm:$0xf]
    %v644 = vld [vmem:[#allocation8 + $0x28] sm:$0xf]
    %v645 = vld [vmem:[#allocation8 + $0x2c] sm:$0xf]
    %v646 = vld [vmem:[#allocation8 + $0x30] sm:$0xf]
    %v647 = vld [vmem:[#allocation8 + $0x34] sm:$0xf]
    %v648 = vld [vmem:[#allocation8 + $0x38] sm:$0xf]
    %v649 = vld [vmem:[#allocation8 + $0x3c] sm:$0xf]
    %v650 = vld [vmem:[%s6] sm:$0x1]
    %v652 = vlaneseq
    %v653 = vshrl.u32 %v652, 7
    %v654 = vsub.s32 0, %v653
    %v655 = vrot.slane %v650, %v654
    %v673 = vunpack.c.l.b16 %v634
    %v674 = vunpack.c.l.b16 %v635
    %v675 = vunpack.c.l.b16 %v636
    %v676 = vunpack.c.l.b16 %v637
    %v677 = vunpack.c.l.b16 %v638
    %v678 = vunpack.c.l.b16 %v639
    %v679 = vunpack.c.l.b16 %v640
    %v680 = vunpack.c.l.b16 %v641
    %v681 = vunpack.c.l.b16 %v642
    %v682 = vunpack.c.l.b16 %v643
    %v683 = vunpack.c.l.b16 %v644
    %v684 = vunpack.c.l.b16 %v645
    %v685 = vunpack.c.l.b16 %v646
    %v686 = vunpack.c.l.b16 %v647
    %v687 = vunpack.c.l.b16 %v648
    %v688 = vunpack.c.l.b16 %v649
    %v689 = vpack.c.b16 %v674, %v673
    %v690 = vpack.c.b16 %v676, %v675
    %v691 = vpack.c.b16 %v678, %v677
    %v692 = vpack.c.b16 %v680, %v679
    %v693 = vpack.c.b16 %v682, %v681
    %v694 = vpack.c.b16 %v684, %v683
    %v695 = vpack.c.b16 %v686, %v685
    %v696 = vpack.c.b16 %v688, %v687
    %705 = vmatprep.subr.bf16.mxu0 0
    %706 = vmatpush1.bf16.msra.mxu0 %v689
    %707 = vmatprep.subr.bf16.mxu0 0
    %708 = vmatpush1.bf16.msra.mxu0 %v690
    %709 = vmatprep.subr.bf16.mxu0 0
    %710 = vmatpush1.bf16.msra.mxu0 %v691
    %711 = vmatprep.subr.bf16.mxu0 0
    %712 = vmatpush1.bf16.msra.mxu0 %v692
    %713 = vmatprep.subr.bf16.mxu0 0
    %714 = vmatpush1.bf16.msra.mxu0 %v693
    %715 = vmatprep.subr.bf16.mxu0 0
    %716 = vmatpush1.bf16.msra.mxu0 %v694
    %717 = vmatprep.subr.bf16.mxu0 0
    %718 = vmatpush1.bf16.msra.mxu0 %v695
    %719 = vmatprep.subr.bf16.mxu0 0
    %720 = vmatpush1.bf16.msra.mxu0 %v696
    %721 = vmatprep.subr.bf16.mxu0 0
    %722 = vmatpush1.bf16.msra.mxu0 0
    %723 = vmatprep.subr.bf16.mxu0 0
    %724 = vmatpush1.bf16.msra.mxu0 0
    %725 = vmatprep.subr.bf16.mxu0 0
    %726 = vmatpush1.bf16.msra.mxu0 0
    %727 = vmatprep.subr.bf16.mxu0 0
    %728 = vmatpush1.bf16.msra.mxu0 0
    %729 = vmatprep.subr.bf16.mxu0 0
    %730 = vmatpush1.bf16.msra.mxu0 0
    %731 = vmatprep.subr.bf16.mxu0 0
    %732 = vmatpush1.bf16.msra.mxu0 0
    %733 = vmatprep.subr.bf16.mxu0 0
    %734 = vmatpush1.bf16.msra.mxu0 0
    %735 = vmatprep.subr.bf16.mxu0 0
    %736 = vmatpush1.bf16.msra.mxu0 0
    %737 = vmatprep.mubr.bf16.mxu0 0
    %738 = vmatmul.mubr.bf16.gmra.mrb[0].mxu0 %v633
    %v739 = vpop.f32.mrb[0].mxu0
    %v740 = vadd.f32 %v655, %v739
    %v741 = vpop.f32.mrb[0].mxu0
    %v742 = vpop.f32.mrb[0].mxu0
    %v743 = vadd.f32 %v655, %v742
    %v744 = vpop.f32.mrb[0].mxu0
    %745 = vdwg.mxu0
    %746 = vst [vmem:[#allocation10] sm:$0xff] %v740
    %747 = vst [vmem:[#allocation10 + $0x8] sm:$0xff] %v743
    // Predicated region
    $region46: #{tpu_custom_call.1} parent=1 // pred_check
      _
    $region47: #{tpu_custom_call.1} parent=1 // pred_check_branch
      %749 = sbr.rel (0) target = $region49
    $region48: #{tpu_custom_call.1} parent=1 // pred_region
      %s751 = ssub.s32 256, 256
      %752 = vsyncadd [#allocation4], %s751
      %s753 = sshll.u32 [#allocation10], 4
      %s754 = int_to_ptr.vmem [resolvable:$true] %s753
      %759 = dma.vmem_to_hbm [thread:$0]  %s754, 256, %s7, [#allocation4], 128, 128, 8
    $region49: #{tpu_custom_call.1} parent=1 // pred_fallthru
      _
    // Predicated region
    $region50: #{tpu_custom_call.1} parent=1 // pred_check
      _
    $region51: #{tpu_custom_call.1} parent=1 // pred_check_branch
      %761 = sbr.rel (0) target = $region53
    $region52: #{tpu_custom_call.1} parent=1 // pred_region
      %s763 = ssub.s32 256, 256
      %764 = vsyncadd [#allocation12], %s763
      %s765 = sshll.u32 [#allocation11], 4
      %s766 = int_to_ptr.vmem [resolvable:$true] %s765
      %771 = dma.vmem_to_hbm [thread:$0]  %s766, 256, %s8, [#allocation12], 128, 128, 8
    $region53: #{tpu_custom_call.1} parent=1 // pred_fallthru
      _
    // Predicated region
    $region54: #{tpu_custom_call.1} parent=1 // pred_check
      _
    $region55: #{tpu_custom_call.1} parent=1 // pred_check_branch
      %773 = sbr.rel (0) target = $region57
    $region56: #{tpu_custom_call.1} parent=1 // pred_region
      %774 = dma.done [#allocation4], 256
    $region57: #{tpu_custom_call.1} parent=1 // pred_fallthru
      _
    // Predicated region
    $region58: #{tpu_custom_call.1} parent=1 // pred_check
      _
    $region59: #{tpu_custom_call.1} parent=1 // pred_check_branch
      %776 = sbr.rel (0) target = $region61
    $region60: #{tpu_custom_call.1} parent=1 // pred_region
      %777 = dma.done [#allocation12], 256
    $region61: #{tpu_custom_call.1} parent=1 // pred_fallthru
      _
    %778 = vsyncpa [#allocation3], 1
    %779 = vsyncpa [#allocation6], 1
    %780 = vsyncpa [#allocation9], 1
    %781 = vsyncpa [#allocation4], 1
    %782 = vsyncpa [#allocation12], 1

</llo_original>
